<compile_context>
chip_gen: v6e
topology: v6e:2x2x1
jax: 0.10.0
libtpu: 0.0.40
codegen_flags: <defaults>
</compile_context>

<pallas_src>
import jax
import jax.numpy as jnp
from jax.experimental import pallas as pl
from jax.experimental.pallas import tpu as pltpu

HIDDEN = 128
SUBLANE = 8


def actor_kernel(x_ref, w1_ref, b1_ref, w2_ref, b2_ref, w3_ref, b3_ref, o_ref):
    # hidden 1: (tb, num_inputs) @ (num_inputs, 128) + (1, 128) -> relu
    # (MXU with fp32 accumulation; K = true num_inputs, no padding)
    h1 = jnp.dot(x_ref[...], w1_ref[...], preferred_element_type=jnp.float32)
    h1 = jnp.maximum(h1 + b1_ref[...], 0.0)
    # hidden 2: cast the fp32 activation back to the (bf16) matmul dtype so
    # the MXU sees matching inputs; accumulation/epilogue stay fp32.
    h2 = jnp.dot(h1.astype(w2_ref.dtype), w2_ref[...],
                 preferred_element_type=jnp.float32)
    h2 = jnp.maximum(h2 + b2_ref[...], 0.0)
    # output: (tb, 128) @ (128, action_size) + (1, action_size) -> tanh
    out = jnp.dot(h2.astype(w3_ref.dtype), w3_ref[...],
                  preferred_element_type=jnp.float32)
    o_ref[...] = jnp.tanh(out + b3_ref[...])


def _round_up(n, m):
    return ((n + m - 1) // m) * m


def _cdiv(a, b):
    return (a + b - 1) // b


def prepare_actor_params(w1, b1, w2, b2, w3, b3, *, matmul_dtype=jnp.bfloat16):
    """One-time weight preparation (cast matmul operands, fp32 row biases).

    Hoisted out of the forward so rollout / eval loops don't repeat the
    cast/reshape XLA ops every call.  Weights are (fan_in, fan_out).
    """
    num_inputs = w1.shape[0]
    action_size = w3.shape[1]
    assert w1.shape == (num_inputs, HIDDEN)
    assert w2.shape == (HIDDEN, HIDDEN)
    assert w3.shape == (HIDDEN, action_size)
    mm = matmul_dtype
    f32 = jnp.float32
    return (
        w1.astype(mm),
        b1.astype(f32).reshape(1, HIDDEN),
        w2.astype(mm),
        b2.astype(f32).reshape(1, HIDDEN),
        w3.astype(mm),
        b3.astype(f32).reshape(1, action_size),
    )


def _choose_tiling(batch, block_b, min_grid):
    """Pick (tb, padded_b, n_tiles) padding the batch only to a multiple of 8."""
    padded8 = _round_up(batch, SUBLANE)
    tb_max = max(_round_up(min(block_b, padded8), SUBLANE), SUBLANE)
    # Guarantee >= min_grid tiles when the batch is big enough so the
    # "parallel" batch axis can be sharded across both TensorCores on v7x.
    if padded8 >= min_grid * SUBLANE:
        tb_max = min(tb_max, _round_up(_cdiv(padded8, min_grid), SUBLANE))
    n = _cdiv(padded8, tb_max)
    tb = _round_up(_cdiv(padded8, n), SUBLANE)   # minimal-padding tile
    padded_b = n * tb
    return tb, padded_b, n


def actor_forward(x, prepared_params, *, block_b=1024, min_grid=2):
    """Batched Actor forward.

    x: (batch, num_inputs) fp32 -> (batch, action_size) fp32.
    prepared_params: output of prepare_actor_params().
    """
    w1_p, b1_p, w2_p, b2_p, w3_p, b3_p = prepared_params
    batch, num_inputs = x.shape
    assert w1_p.shape[0] == num_inputs
    action_size = w3_p.shape[1]
    mm = w1_p.dtype

    tb, padded_b, n_tiles = _choose_tiling(batch, block_b, min_grid)

    # Stream x in the matmul dtype (bf16 halves the dominant HBM read).
    x_mm = x.astype(mm)
    if padded_b != batch:
        x_mm = jnp.zeros((padded_b, num_inputs), mm).at[:batch].set(x_mm)

    itemsize = jnp.dtype(mm).itemsize
    bytes_accessed = (
        padded_b * num_inputs * itemsize                      # x stream
        + (w1_p.size + w2_p.size + w3_p.size) * itemsize      # resident weights
        + (b1_p.size + b2_p.size + b3_p.size) * 4             # resident biases
        + padded_b * action_size * 4                          # output stream
    )
    cost = pl.CostEstimate(
        flops=2 * batch * (num_inputs * HIDDEN + HIDDEN * HIDDEN
                           + HIDDEN * action_size),
        transcendentals=batch * action_size,
        bytes_accessed=bytes_accessed,
    )

    const = lambda i: (0, 0)  # weights/biases: same block every step -> VMEM-resident
    out_padded = pl.pallas_call(
        actor_kernel,
        out_shape=jax.ShapeDtypeStruct((padded_b, action_size), jnp.float32),
        grid=(n_tiles,),
        in_specs=[
            pl.BlockSpec((tb, num_inputs), lambda i: (i, 0)),  # x: per-batch-tile stream
            pl.BlockSpec((num_inputs, HIDDEN), const),
            pl.BlockSpec((1, HIDDEN), const),
            pl.BlockSpec((HIDDEN, HIDDEN), const),
            pl.BlockSpec((1, HIDDEN), const),
            pl.BlockSpec((HIDDEN, action_size), const),
            pl.BlockSpec((1, action_size), const),
        ],
        out_specs=pl.BlockSpec((tb, action_size), lambda i: (i, 0)),
        compiler_params=pltpu.CompilerParams(
            dimension_semantics=("parallel",),  # shard batch tiles across TCs (v7x)
        ),
        cost_estimate=cost,
    )(x_mm, w1_p, b1_p, w2_p, b2_p, w3_p, b3_p)

    if padded_b != batch:
        return out_padded[:batch]
    return out_padded


def init_actor_params(key, num_inputs, action_size, hidden=HIDDEN):
    """Deterministic init mimicking nn.Linear's U(-1/sqrt(fan_in), 1/sqrt(fan_in)).
    Weights stored as (fan_in, fan_out)."""
    keys = jax.random.split(key, 6)

    def linear(kw, kb, fan_in, fan_out):
        bound = 1.0 / jnp.sqrt(jnp.float32(fan_in))
        w = jax.random.uniform(kw, (fan_in, fan_out), jnp.float32, -bound, bound)
        b = jax.random.uniform(kb, (1, fan_out), jnp.float32, -bound, bound)
        return w, b

    w1, b1 = linear(keys[0], keys[1], num_inputs, hidden)
    w2, b2 = linear(keys[2], keys[3], hidden, hidden)
    w3, b3 = linear(keys[4], keys[5], hidden, action_size)
    return w1, b1, w2, b2, w3, b3


if __name__ == "__main__":
    num_inputs = 32
    action_size = 8
    batch = 2

    key = jax.random.PRNGKey(0)
    k_params, k_x, k_xl = jax.random.split(key, 3)
    w1, b1, w2, b2, w3, b3 = init_actor_params(k_params, num_inputs, action_size)

    def reference(xx):
        h = jnp.maximum(xx @ w1 + b1, 0.0)
        h = jnp.maximum(h @ w2 + b2, 0.0)
        return jnp.tanh(h @ w3 + b3)

    # --- exact fp32 matmul path, small batch (single-state style) ---
    params_f32 = prepare_actor_params(w1, b1, w2, b2, w3, b3,
                                      matmul_dtype=jnp.float32)
    x = jax.random.normal(k_x, (batch, num_inputs), jnp.float32)
    out = actor_forward(x, params_f32)
    jax.block_until_ready(out)
    assert out.shape == (batch, action_size)
    assert jnp.allclose(out, reference(x), atol=1e-5), "fp32 mismatch vs. reference"

    # --- default bf16 MXU path (all generations), multi-tile grid ---
    params_bf16 = prepare_actor_params(w1, b1, w2, b2, w3, b3)  # bf16 default
    xl = jax.random.normal(k_xl, (260, num_inputs), jnp.float32)  # non-multiple of tile
    outl = actor_forward(xl, params_bf16, block_b=128)
    jax.block_until_ready(outl)
    assert outl.shape == (260, action_size)
    assert jnp.allclose(outl, reference(xl), atol=5e-2), "bf16 mismatch vs. reference"

    print("KERNEL_OK")
</pallas_src>

<mosaic_0001>
module attributes {stable_mosaic.version = 11 : i64} {
  func.func @actor_kernel(%arg0: i32, %arg1: memref<8x32xf32, #tpu.memory_space<vmem>>, %arg2: memref<32x128xf32, #tpu.memory_space<vmem>>, %arg3: memref<1x128xf32, #tpu.memory_space<vmem>>, %arg4: memref<128x128xf32, #tpu.memory_space<vmem>>, %arg5: memref<1x128xf32, #tpu.memory_space<vmem>>, %arg6: memref<128x8xf32, #tpu.memory_space<vmem>>, %arg7: memref<1x8xf32, #tpu.memory_space<vmem>>, %arg8: memref<8x8xf32, #tpu.memory_space<vmem>>) attributes {dimension_semantics = [#tpu.dimension_semantics<parallel>], iteration_bounds = array<i64: 1>, scalar_prefetch = 0 : i64, scratch_operands = 0 : i64, tpu.core_type = #tpu.core_type<tc>, window_params = [{transform_indices = @transform_0, window_bounds = array<i64: 8, 32>}, {pipeline_mode = #tpu.pipeline_mode<synchronous>, transform_indices = @transform_1, window_bounds = array<i64: 32, 128>}, {pipeline_mode = #tpu.pipeline_mode<synchronous>, transform_indices = @transform_2, window_bounds = array<i64: 1, 128>}, {pipeline_mode = #tpu.pipeline_mode<synchronous>, transform_indices = @transform_3, window_bounds = array<i64: 128, 128>}, {pipeline_mode = #tpu.pipeline_mode<synchronous>, transform_indices = @transform_4, window_bounds = array<i64: 1, 128>}, {pipeline_mode = #tpu.pipeline_mode<synchronous>, transform_indices = @transform_5, window_bounds = array<i64: 128, 8>}, {pipeline_mode = #tpu.pipeline_mode<synchronous>, transform_indices = @transform_6, window_bounds = array<i64: 1, 8>}, {transform_indices = @transform_7, window_bounds = array<i64: 8, 8>}]} {
    %c0 = arith.constant 0 : index
    %c0_0 = arith.constant 0 : index
    %0 = vector.load %arg1[%c0, %c0_0] : memref<8x32xf32, #tpu.memory_space<vmem>>, vector<8x32xf32>
    %c0_1 = arith.constant 0 : index
    %c0_2 = arith.constant 0 : index
    %1 = vector.load %arg2[%c0_1, %c0_2] : memref<32x128xf32, #tpu.memory_space<vmem>>, vector<32x128xf32>
    %cst = arith.constant dense<0.000000e+00> : vector<8x128xf32>
    %2 = tpu.matmul %0, %1, %cst {dimension_numbers = #tpu.dot_dimension_numbers<[1], [0], [0], [1], [0, 0, 1, 1], [], []>} : vector<8x32xf32>, vector<32x128xf32>, vector<8x128xf32> -> vector<8x128xf32>
    %c0_3 = arith.constant 0 : index
    %c0_4 = arith.constant 0 : index
    %3 = vector.load %arg3[%c0_3, %c0_4] : memref<1x128xf32, #tpu.memory_space<vmem>>, vector<1x128xf32>
    %4 = vector.broadcast %3 : vector<1x128xf32> to vector<8x128xf32>
    %5 = arith.addf %2, %4 : vector<8x128xf32>
    %cst_5 = arith.constant 0.000000e+00 : f32
    %6 = vector.broadcast %cst_5 : f32 to vector<8x128xf32>
    %7 = arith.maximumf %5, %6 : vector<8x128xf32>
    %c0_6 = arith.constant 0 : index
    %c0_7 = arith.constant 0 : index
    %8 = vector.load %arg4[%c0_6, %c0_7] : memref<128x128xf32, #tpu.memory_space<vmem>>, vector<128x128xf32>
    %cst_8 = arith.constant dense<0.000000e+00> : vector<8x128xf32>
    %9 = tpu.matmul %7, %8, %cst_8 {dimension_numbers = #tpu.dot_dimension_numbers<[1], [0], [0], [1], [0, 0, 1, 1], [], []>} : vector<8x128xf32>, vector<128x128xf32>, vector<8x128xf32> -> vector<8x128xf32>
    %c0_9 = arith.constant 0 : index
    %c0_10 = arith.constant 0 : index
    %10 = vector.load %arg5[%c0_9, %c0_10] : memref<1x128xf32, #tpu.memory_space<vmem>>, vector<1x128xf32>
    %11 = vector.broadcast %10 : vector<1x128xf32> to vector<8x128xf32>
    %12 = arith.addf %9, %11 : vector<8x128xf32>
    %cst_11 = arith.constant 0.000000e+00 : f32
    %13 = vector.broadcast %cst_11 : f32 to vector<8x128xf32>
    %14 = arith.maximumf %12, %13 : vector<8x128xf32>
    %c0_12 = arith.constant 0 : index
    %c0_13 = arith.constant 0 : index
    %15 = vector.load %arg6[%c0_12, %c0_13] : memref<128x8xf32, #tpu.memory_space<vmem>>, vector<128x8xf32>
    %cst_14 = arith.constant dense<0.000000e+00> : vector<8x8xf32>
    %16 = tpu.matmul %14, %15, %cst_14 {dimension_numbers = #tpu.dot_dimension_numbers<[1], [0], [0], [1], [0, 0, 1, 1], [], []>} : vector<8x128xf32>, vector<128x8xf32>, vector<8x8xf32> -> vector<8x8xf32>
    %c0_15 = arith.constant 0 : index
    %c0_16 = arith.constant 0 : index
    %17 = vector.load %arg7[%c0_15, %c0_16] : memref<1x8xf32, #tpu.memory_space<vmem>>, vector<1x8xf32>
    %18 = vector.broadcast %17 : vector<1x8xf32> to vector<8x8xf32>
    %19 = arith.addf %16, %18 : vector<8x8xf32>
    %20 = math.tanh %19 : vector<8x8xf32>
    %c0_17 = arith.constant 0 : index
    %c0_18 = arith.constant 0 : index
    %21 = vector.load %arg8[%c0_17, %c0_18] : memref<8x8xf32, #tpu.memory_space<vmem>>, vector<8x8xf32>
    tpu.vector_store %arg8[%c0_17, %c0_18], %20 {strides = array<i32>} : memref<8x8xf32, #tpu.memory_space<vmem>>, vector<8x8xf32>,
    return
  }
  func.func @transform_0(%arg0: i32) -> (i32, i32) {
    %c0_i32 = arith.constant 0 : i32
    %c0_i32_0 = arith.constant 0 : i32
    return %arg0, %c0_i32 : i32, i32
  }
  func.func @transform_1(%arg0: i32) -> (i32, i32) {
    %c0_i32 = arith.constant 0 : i32
    %c0_i32_0 = arith.constant 0 : i32
    %c0_i32_1 = arith.constant 0 : i32
    return %c0_i32, %c0_i32_0 : i32, i32
  }
  func.func @transform_2(%arg0: i32) -> (i32, i32) {
    %c0_i32 = arith.constant 0 : i32
    %c0_i32_0 = arith.constant 0 : i32
    %c0_i32_1 = arith.constant 0 : i32
    return %c0_i32, %c0_i32_0 : i32, i32
  }
  func.func @transform_3(%arg0: i32) -> (i32, i32) {
    %c0_i32 = arith.constant 0 : i32
    %c0_i32_0 = arith.constant 0 : i32
    %c0_i32_1 = arith.constant 0 : i32
    return %c0_i32, %c0_i32_0 : i32, i32
  }
  func.func @transform_4(%arg0: i32) -> (i32, i32) {
    %c0_i32 = arith.constant 0 : i32
    %c0_i32_0 = arith.constant 0 : i32
    %c0_i32_1 = arith.constant 0 : i32
    return %c0_i32, %c0_i32_0 : i32, i32
  }
  func.func @transform_5(%arg0: i32) -> (i32, i32) {
    %c0_i32 = arith.constant 0 : i32
    %c0_i32_0 = arith.constant 0 : i32
    %c0_i32_1 = arith.constant 0 : i32
    return %c0_i32, %c0_i32_0 : i32, i32
  }
  func.func @transform_6(%arg0: i32) -> (i32, i32) {
    %c0_i32 = arith.constant 0 : i32
    %c0_i32_0 = arith.constant 0 : i32
    %c0_i32_1 = arith.constant 0 : i32
    return %c0_i32, %c0_i32_0 : i32, i32
  }
  func.func @transform_7(%arg0: i32) -> (i32, i32) {
    %c0_i32 = arith.constant 0 : i32
    %c0_i32_0 = arith.constant 0 : i32
    return %arg0, %c0_i32 : i32, i32
  }
}

</mosaic_0001>

<llo_original>
// kernel: tpu_custom_call.1
$region0: #{tpu_custom_call.1}
  #allocation0 [shape = 'u32[]', space=smem, size = 0x4, offset = 0x4, fixed_abs, tag = 'smem constant byte address 0x4 - core index']
  #allocation1 [shape = 'u32[144,128]{1,0:T(1,128)}', space=vmem, size = 0x12000, scoped, tag = 'internal scratch']
  %s0 = inlined_call_operand.vmem [shape: f32[8,32], index: 0, kind: input, shape index: {}]
  %s1 = inlined_call_operand.hbm [shape: f32[32,128], index: 1, kind: input, shape index: {}]
  %s2 = inlined_call_operand.vmem [shape: f32[1,128], index: 2, kind: input, shape index: {}]
  %s3 = inlined_call_operand.vmem [shape: f32[128,128], index: 3, kind: input, shape index: {}]
  %s4 = inlined_call_operand.hbm [shape: f32[1,128], index: 4, kind: input, shape index: {}]
  %s5 = inlined_call_operand.vmem [shape: f32[128,8], index: 5, kind: input, shape index: {}]
  %s6 = inlined_call_operand.vmem [shape: f32[1,8], index: 6, kind: input, shape index: {}]
  %s7 = inlined_call_operand.hbm [shape: f32[8,8], index: 7, kind: output, shape index: {}]
  %s8 = sld [smem:[#allocation0]]
  $region46: #{tpu_custom_call.1} parent=0
    _
  %s10 = ssub.s32 1, %s8
  %s11 = scalar_select 0, %s10, %s8
  $region1: #{tpu_custom_call.1} parent=0
    #allocation2 [shape = 'u8[16384]{0}', space=vmem, size = 0x4000, scoped, tag = 'input window, operand 1, single buffered']
    #allocation3 [shape = 's32[1]{0}', space=sflag, size = 0x4, scoped, tag = 'scoped memory for tpu_custom_call.1']
    #allocation4 [shape = 's32[1]{0}', space=sflag, size = 0x4, scoped, tag = 'scoped memory for tpu_custom_call.1']
    #allocation5 [shape = 'u8[512]{0}', space=vmem, size = 0x400, scoped, tag = 'input window, operand 4, single buffered']
    #allocation6 [shape = 's32[1]{0}', space=sflag, size = 0x4, scoped, tag = 'scoped memory for tpu_custom_call.1']
    #allocation7 [shape = 'u8[4096]{0}', space=vmem, size = 0x1000, scoped, tag = 'output window, operand 0, single buffered']
    %12 = vsyncpa [#allocation3], 0
    %13 = vsyncpa [#allocation6], 0
    %14 = vsyncpa [#allocation4], 0
    // Predicated region
    $region2: #{tpu_custom_call.1} parent=1 // pred_check
      _
    $region3: #{tpu_custom_call.1} parent=1 // pred_check_branch
      %16 = sbr.rel (0) target = $region5
    $region4: #{tpu_custom_call.1} parent=1 // pred_region
      _
    $region5: #{tpu_custom_call.1} parent=1 // pred_fallthru
      _
    // Predicated region
    $region6: #{tpu_custom_call.1} parent=1 // pred_check
      _
    $region7: #{tpu_custom_call.1} parent=1 // pred_check_branch
      %18 = sbr.rel (0) target = $region9
    $region8: #{tpu_custom_call.1} parent=1 // pred_region
      %s20 = ssub.s32 512, 512
      %21 = vsyncadd [#allocation3], %s20
      %s22 = sshll.u32 [#allocation2], 4
      %s23 = int_to_ptr.vmem [resolvable:$true] %s22
      %28 = dma.hbm_to_vmem [thread:$0]  %s1, 512, %s23, [#allocation3], 128, 128, 8
    $region9: #{tpu_custom_call.1} parent=1 // pred_fallthru
      _
    // Predicated region
    $region10: #{tpu_custom_call.1} parent=1 // pred_check
      _
    $region11: #{tpu_custom_call.1} parent=1 // pred_check_branch
      %30 = sbr.rel (0) target = $region13
    $region12: #{tpu_custom_call.1} parent=1 // pred_region
      _
    $region13: #{tpu_custom_call.1} parent=1 // pred_fallthru
      _
    // Predicated region
    $region14: #{tpu_custom_call.1} parent=1 // pred_check
      _
    $region15: #{tpu_custom_call.1} parent=1 // pred_check_branch
      %32 = sbr.rel (0) target = $region17
    $region16: #{tpu_custom_call.1} parent=1 // pred_region
      _
    $region17: #{tpu_custom_call.1} parent=1 // pred_fallthru
      _
    // Predicated region
    $region18: #{tpu_custom_call.1} parent=1 // pred_check
      _
    $region19: #{tpu_custom_call.1} parent=1 // pred_check_branch
      %34 = sbr.rel (0) target = $region21
    $region20: #{tpu_custom_call.1} parent=1 // pred_region
      %s36 = ssub.s32 16, 16
      %37 = vsyncadd [#allocation6], %s36
      %s39 = sshll.u32 [#allocation5], 4
      %s40 = int_to_ptr.vmem [resolvable:$true] %s39
      %42 = dma.hbm_to_vmem [thread:$0]  %s4, 16, %s40, [#allocation6]
    $region21: #{tpu_custom_call.1} parent=1 // pred_fallthru
      _
    // Predicated region
    $region22: #{tpu_custom_call.1} parent=1 // pred_check
      _
    $region23: #{tpu_custom_call.1} parent=1 // pred_check_branch
      %44 = sbr.rel (0) target = $region25
    $region24: #{tpu_custom_call.1} parent=1 // pred_region
      _
    $region25: #{tpu_custom_call.1} parent=1 // pred_fallthru
      _
    // Predicated region
    $region26: #{tpu_custom_call.1} parent=1 // pred_check
      _
    $region27: #{tpu_custom_call.1} parent=1 // pred_check_branch
      %46 = sbr.rel (0) target = $region29
    $region28: #{tpu_custom_call.1} parent=1 // pred_region
      _
    $region29: #{tpu_custom_call.1} parent=1 // pred_fallthru
      _
    // Predicated region
    $region30: #{tpu_custom_call.1} parent=1 // pred_check
      _
    $region31: #{tpu_custom_call.1} parent=1 // pred_check_branch
      %48 = sbr.rel (0) target = $region33
    $region32: #{tpu_custom_call.1} parent=1 // pred_region
      %49 = dma.done [#allocation3], 512
    $region33: #{tpu_custom_call.1} parent=1 // pred_fallthru
      _
    // Predicated region
    $region34: #{tpu_custom_call.1} parent=1 // pred_check
      _
    $region35: #{tpu_custom_call.1} parent=1 // pred_check_branch
      %51 = sbr.rel (0) target = $region37
    $region36: #{tpu_custom_call.1} parent=1 // pred_region
      %52 = dma.done [#allocation6], 16
    $region37: #{tpu_custom_call.1} parent=1 // pred_fallthru
      _
    %v53 = vld [vmem:[%s0] sm:$0xff]
    %v54 = vld [vmem:[#allocation2] sm:$0xff]
    %v55 = vld [vmem:[#allocation2 + $0x8] sm:$0xff]
    %v56 = vld [vmem:[#allocation2 + $0x10] sm:$0xff]
    %v57 = vld [vmem:[#allocation2 + $0x18] sm:$0xff]
    %v58 = vld [vmem:[%s2] sm:$0x1]
    %v60 = vlaneseq
    %v61 = vshrl.u32 %v60, 7
    %v62 = vsub.s32 0, %v61
    %v63 = vrot.slane %v58, %v62
    %vm65 = vcmask 261120
    %v67 = vsel %vm65, %v53, 0
    %69 = vmatprep.subr.mxu0 0.0
    %70 = vmatpush1.msra.mxu0 0.0
    %71 = vmatprep.subr.mxu0 0.0
    %72 = vmatpush1.msra.mxu0 0.0
    %73 = vmatprep.subr.mxu0 0.0
    %74 = vmatpush1.msra.mxu0 0.0
    %75 = vmatprep.subr.mxu0 0.0
    %76 = vmatpush1.msra.mxu0 0.0
    %77 = vmatprep.subr.mxu0 0.0
    %78 = vmatpush1.msra.mxu0 0.0
    %79 = vmatprep.subr.mxu0 0.0
    %80 = vmatpush1.msra.mxu0 0.0
    %81 = vmatprep.subr.mxu0 0.0
    %82 = vmatpush1.msra.mxu0 0.0
    %83 = vmatprep.subr.mxu0 0.0
    %84 = vmatpush1.msra.mxu0 0.0
    %85 = vmatprep.subr.mxu0 0.0
    %86 = vmatpush1.msra.mxu0 0.0
    %87 = vmatprep.subr.mxu0 0.0
    %88 = vmatpush1.msra.mxu0 0.0
    %89 = vmatprep.subr.mxu0 0.0
    %90 = vmatpush1.msra.mxu0 0.0
    %91 = vmatprep.subr.mxu0 0.0
    %92 = vmatpush1.msra.mxu0 0.0
    %93 = vmatprep.subr.mxu0 0.0
    %94 = vmatpush1.msra.mxu0 %v57
    %95 = vmatprep.subr.mxu0 0.0
    %96 = vmatpush1.msra.mxu0 %v56
    %97 = vmatprep.subr.mxu0 0.0
    %98 = vmatpush1.msra.mxu0 %v55
    %99 = vmatprep.subr.mxu0 0.0
    %100 = vmatpush1.msra.mxu0 %v54
    %101 = vmatprep.subr.mxu0 0.0
    %102 = vmatpush2.msra.mxu0 0.0
    %103 = vmatprep.subr.mxu0 0.0
    %104 = vmatpush2.msra.mxu0 0.0
    %105 = vmatprep.subr.mxu0 0.0
    %106 = vmatpush2.msra.mxu0 0.0
    %107 = vmatprep.subr.mxu0 0.0
    %108 = vmatpush2.msra.mxu0 0.0
    %109 = vmatprep.subr.mxu0 0.0
    %110 = vmatpush2.msra.mxu0 0.0
    %111 = vmatprep.subr.mxu0 0.0
    %112 = vmatpush2.msra.mxu0 0.0
    %113 = vmatprep.subr.mxu0 0.0
    %114 = vmatpush2.msra.mxu0 0.0
    %115 = vmatprep.subr.mxu0 0.0
    %116 = vmatpush2.msra.mxu0 0.0
    %117 = vmatprep.subr.mxu0 0.0
    %118 = vmatpush2.msra.mxu0 0.0
    %119 = vmatprep.subr.mxu0 0.0
    %120 = vmatpush2.msra.mxu0 0.0
    %121 = vmatprep.subr.mxu0 0.0
    %122 = vmatpush2.msra.mxu0 0.0
    %123 = vmatprep.subr.mxu0 0.0
    %124 = vmatpush2.msra.mxu0 0.0
    %125 = vmatprep.subr.mxu0 0.0
    %126 = vmatpush2.msra.mxu0 0.0
    %127 = vmatprep.subr.mxu0 0.0
    %128 = vmatpush2.msra.mxu0 0.0
    %129 = vmatprep.subr.mxu0 0.0
    %130 = vmatpush2.msra.mxu0 0.0
    %131 = vmatprep.subr.mxu0 0.0
    %132 = vmatpush2.msra.mxu0 0.0
    %133 = vmatprep.mubr.f32.mxu0 0.0
    %134 = vmatmul.mubr.f32.gmra.mxu0 %v67
    %v135 = vpop.f32.mrf.mxu0
    %v136 = vadd.f32 %v63, %v135
    %v137 = vpop.f32.mrf.mxu0
    %138 = vdwg.mxu0
    %v139 = vmax.f32 %v136, 0.0
    %v140 = vld [vmem:[%s3] sm:$0xff]
    %v141 = vld [vmem:[%s3 + $0x8] sm:$0xff]
    %v142 = vld [vmem:[%s3 + $0x10] sm:$0xff]
    %v143 = vld [vmem:[%s3 + $0x18] sm:$0xff]
    %v144 = vld [vmem:[%s3 + $0x20] sm:$0xff]
    %v145 = vld [vmem:[%s3 + $0x28] sm:$0xff]
    %v146 = vld [vmem:[%s3 + $0x30] sm:$0xff]
    %v147 = vld [vmem:[%s3 + $0x38] sm:$0xff]
    %v148 = vld [vmem:[%s3 + $0x40] sm:$0xff]
    %v149 = vld [vmem:[%s3 + $0x48] sm:$0xff]
    %v150 = vld [vmem:[%s3 + $0x50] sm:$0xff]
    %v151 = vld [vmem:[%s3 + $0x58] sm:$0xff]
    %v152 = vld [vmem:[%s3 + $0x60] sm:$0xff]
    %v153 = vld [vmem:[%s3 + $0x68] sm:$0xff]
    %v154 = vld [vmem:[%s3 + $0x70] sm:$0xff]
    %v155 = vld [vmem:[%s3 + $0x78] sm:$0xff]
    %v156 = vld [vmem:[#allocation5] sm:$0x1]
    %v158 = vlaneseq
    %v159 = vshrl.u32 %v158, 7
    %v160 = vsub.s32 0, %v159
    %v161 = vrot.slane %v156, %v160
    %163 = vmatprep.subr.mxu0 0.0
    %164 = vmatpush1.msra.mxu0 %v155
    %165 = vmatprep.subr.mxu0 0.0
    %166 = vmatpush1.msra.mxu0 %v154
    %167 = vmatprep.subr.mxu0 0.0
    %168 = vmatpush1.msra.mxu0 %v153
    %169 = vmatprep.subr.mxu0 0.0
    %170 = vmatpush1.msra.mxu0 %v152
    %171 = vmatprep.subr.mxu0 0.0
    %172 = vmatpush1.msra.mxu0 %v151
    %173 = vmatprep.subr.mxu0 0.0
    %174 = vmatpush1.msra.mxu0 %v150
    %175 = vmatprep.subr.mxu0 0.0
    %176 = vmatpush1.msra.mxu0 %v149
    %177 = vmatprep.subr.mxu0 0.0
    %178 = vmatpush1.msra.mxu0 %v148
    %179 = vmatprep.subr.mxu0 0.0
    %180 = vmatpush1.msra.mxu0 %v147
    %181 = vmatprep.subr.mxu0 0.0
    %182 = vmatpush1.msra.mxu0 %v146
    %183 = vmatprep.subr.mxu0 0.0
    %184 = vmatpush1.msra.mxu0 %v145
    %185 = vmatprep.subr.mxu0 0.0
    %186 = vmatpush1.msra.mxu0 %v144
    %187 = vmatprep.subr.mxu0 0.0
    %188 = vmatpush1.msra.mxu0 %v143
    %189 = vmatprep.subr.mxu0 0.0
    %190 = vmatpush1.msra.mxu0 %v142
    %191 = vmatprep.subr.mxu0 0.0
    %192 = vmatpush1.msra.mxu0 %v141
    %193 = vmatprep.subr.mxu0 0.0
    %194 = vmatpush1.msra.mxu0 %v140
    %195 = vmatprep.subr.mxu0 0.0
    %196 = vmatpush2.msra.mxu0 0.0
    %197 = vmatprep.subr.mxu0 0.0
    %198 = vmatpush2.msra.mxu0 0.0
    %199 = vmatprep.subr.mxu0 0.0
    %200 = vmatpush2.msra.mxu0 0.0
    %201 = vmatprep.subr.mxu0 0.0
    %202 = vmatpush2.msra.mxu0 0.0
    %203 = vmatprep.subr.mxu0 0.0
    %204 = vmatpush2.msra.mxu0 0.0
    %205 = vmatprep.subr.mxu0 0.0
    %206 = vmatpush2.msra.mxu0 0.0
    %207 = vmatprep.subr.mxu0 0.0
    %208 = vmatpush2.msra.mxu0 0.0
    %209 = vmatprep.subr.mxu0 0.0
    %210 = vmatpush2.msra.mxu0 0.0
    %211 = vmatprep.subr.mxu0 0.0
    %212 = vmatpush2.msra.mxu0 0.0
    %213 = vmatprep.subr.mxu0 0.0
    %214 = vmatpush2.msra.mxu0 0.0
    %215 = vmatprep.subr.mxu0 0.0
    %216 = vmatpush2.msra.mxu0 0.0
    %217 = vmatprep.subr.mxu0 0.0
    %218 = vmatpush2.msra.mxu0 0.0
    %219 = vmatprep.subr.mxu0 0.0
    %220 = vmatpush2.msra.mxu0 0.0
    %221 = vmatprep.subr.mxu0 0.0
    %222 = vmatpush2.msra.mxu0 0.0
    %223 = vmatprep.subr.mxu0 0.0
    %224 = vmatpush2.msra.mxu0 0.0
    %225 = vmatprep.subr.mxu0 0.0
    %226 = vmatpush2.msra.mxu0 0.0
    %227 = vmatprep.mubr.f32.mxu0 0.0
    %228 = vmatmul.mubr.f32.gmra.mxu0 %v139
    %v229 = vpop.f32.mrf.mxu0
    %v230 = vadd.f32 %v161, %v229
    %v231 = vpop.f32.mrf.mxu0
    %232 = vdwg.mxu0
    %v233 = vmax.f32 %v230, 0.0
    %v234 = vld [vmem:[%s5] sm:$0xff]
    %v235 = vld [vmem:[%s5 + $0x8] sm:$0xff]
    %v236 = vld [vmem:[%s5 + $0x10] sm:$0xff]
    %v237 = vld [vmem:[%s5 + $0x18] sm:$0xff]
    %v238 = vld [vmem:[%s5 + $0x20] sm:$0xff]
    %v239 = vld [vmem:[%s5 + $0x28] sm:$0xff]
    %v240 = vld [vmem:[%s5 + $0x30] sm:$0xff]
    %v241 = vld [vmem:[%s5 + $0x38] sm:$0xff]
    %v242 = vld [vmem:[%s5 + $0x40] sm:$0xff]
    %v243 = vld [vmem:[%s5 + $0x48] sm:$0xff]
    %v244 = vld [vmem:[%s5 + $0x50] sm:$0xff]
    %v245 = vld [vmem:[%s5 + $0x58] sm:$0xff]
    %v246 = vld [vmem:[%s5 + $0x60] sm:$0xff]
    %v247 = vld [vmem:[%s5 + $0x68] sm:$0xff]
    %v248 = vld [vmem:[%s5 + $0x70] sm:$0xff]
    %v249 = vld [vmem:[%s5 + $0x78] sm:$0xff]
    %v250 = vld [vmem:[%s6] sm:$0x1]
    %v252 = vlaneseq
    %v253 = vshrl.u32 %v252, 7
    %v254 = vsub.s32 0, %v253
    %v255 = vrot.slane %v250, %v254
    %257 = vmatprep.subr.mxu0 0.0
    %258 = vmatpush1.msra.mxu0 %v249
    %259 = vmatprep.subr.mxu0 0.0
    %260 = vmatpush1.msra.mxu0 %v248
    %261 = vmatprep.subr.mxu0 0.0
    %262 = vmatpush1.msra.mxu0 %v247
    %263 = vmatprep.subr.mxu0 0.0
    %264 = vmatpush1.msra.mxu0 %v246
    %265 = vmatprep.subr.mxu0 0.0
    %266 = vmatpush1.msra.mxu0 %v245
    %267 = vmatprep.subr.mxu0 0.0
    %268 = vmatpush1.msra.mxu0 %v244
    %269 = vmatprep.subr.mxu0 0.0
    %270 = vmatpush1.msra.mxu0 %v243
    %271 = vmatprep.subr.mxu0 0.0
    %272 = vmatpush1.msra.mxu0 %v242
    %273 = vmatprep.subr.mxu0 0.0
    %274 = vmatpush1.msra.mxu0 %v241
    %275 = vmatprep.subr.mxu0 0.0
    %276 = vmatpush1.msra.mxu0 %v240
    %277 = vmatprep.subr.mxu0 0.0
    %278 = vmatpush1.msra.mxu0 %v239
    %279 = vmatprep.subr.mxu0 0.0
    %280 = vmatpush1.msra.mxu0 %v238
    %281 = vmatprep.subr.mxu0 0.0
    %282 = vmatpush1.msra.mxu0 %v237
    %283 = vmatprep.subr.mxu0 0.0
    %284 = vmatpush1.msra.mxu0 %v236
    %285 = vmatprep.subr.mxu0 0.0
    %286 = vmatpush1.msra.mxu0 %v235
    %287 = vmatprep.subr.mxu0 0.0
    %288 = vmatpush1.msra.mxu0 %v234
    %289 = vmatprep.subr.mxu0 0.0
    %290 = vmatpush2.msra.mxu0 0.0
    %291 = vmatprep.subr.mxu0 0.0
    %292 = vmatpush2.msra.mxu0 0.0
    %293 = vmatprep.subr.mxu0 0.0
    %294 = vmatpush2.msra.mxu0 0.0
    %295 = vmatprep.subr.mxu0 0.0
    %296 = vmatpush2.msra.mxu0 0.0
    %297 = vmatprep.subr.mxu0 0.0
    %298 = vmatpush2.msra.mxu0 0.0
    %299 = vmatprep.subr.mxu0 0.0
    %300 = vmatpush2.msra.mxu0 0.0
    %301 = vmatprep.subr.mxu0 0.0
    %302 = vmatpush2.msra.mxu0 0.0
    %303 = vmatprep.subr.mxu0 0.0
    %304 = vmatpush2.msra.mxu0 0.0
    %305 = vmatprep.subr.mxu0 0.0
    %306 = vmatpush2.msra.mxu0 0.0
    %307 = vmatprep.subr.mxu0 0.0
    %308 = vmatpush2.msra.mxu0 0.0
    %309 = vmatprep.subr.mxu0 0.0
    %310 = vmatpush2.msra.mxu0 0.0
    %311 = vmatprep.subr.mxu0 0.0
    %312 = vmatpush2.msra.mxu0 0.0
    %313 = vmatprep.subr.mxu0 0.0
    %314 = vmatpush2.msra.mxu0 0.0
    %315 = vmatprep.subr.mxu0 0.0
    %316 = vmatpush2.msra.mxu0 0.0
    %317 = vmatprep.subr.mxu0 0.0
    %318 = vmatpush2.msra.mxu0 0.0
    %319 = vmatprep.subr.mxu0 0.0
    %320 = vmatpush2.msra.mxu0 0.0
    %321 = vmatprep.mubr.f32.mxu0 0.0
    %322 = vmatmul.mubr.f32.gmra.mxu0 %v233
    %v323 = vpop.f32.mrf.mxu0
    %v324 = vadd.f32 %v255, %v323
    %v325 = vpop.f32.mrf.mxu0
    %326 = vdwg.mxu0
    %v327 = vtanh.pop %v324
    %vm328 = vcmask 64512
    %329 = vst.msk [vmem:[#allocation7] sm:$0xff] %vm328, %v327
    // Predicated region
    $region38: #{tpu_custom_call.1} parent=1 // pred_check
      _
    $region39: #{tpu_custom_call.1} parent=1 // pred_check_branch
      %331 = sbr.rel (0) target = $region41
    $region40: #{tpu_custom_call.1} parent=1 // pred_region
      %s333 = ssub.s32 128, 128
      %334 = vsyncadd [#allocation4], %s333
      %s336 = sshll.u32 [#allocation7], 4
      %s337 = int_to_ptr.vmem [resolvable:$true] %s336
      %339 = dma.vmem_to_hbm [thread:$0]  %s337, 128, %s7, [#allocation4]
    $region41: #{tpu_custom_call.1} parent=1 // pred_fallthru
      _
    // Predicated region
    $region42: #{tpu_custom_call.1} parent=1 // pred_check
      _
    $region43: #{tpu_custom_call.1} parent=1 // pred_check_branch
      %341 = sbr.rel (0) target = $region45
    $region44: #{tpu_custom_call.1} parent=1 // pred_region
      %342 = dma.done [#allocation4], 128
    $region45: #{tpu_custom_call.1} parent=1 // pred_fallthru
      _
    %343 = vsyncpa [#allocation3], 1
    %344 = vsyncpa [#allocation6], 1
    %345 = vsyncpa [#allocation4], 1

</llo_original>
